<compile_context>
chip_gen: v7x
topology: tpu7x:2x2x1
jax: 0.10.0
libtpu: 0.0.40
codegen_flags: <defaults>
</compile_context>

<pallas_src>
import math

import jax
import jax.numpy as jnp
from jax.experimental import pallas as pl
from jax.experimental.pallas import tpu as pltpu


def _sir_mlp_kernel(x_ref,
                    w1_ref, b1_ref,
                    w2_ref, b2_ref,
                    w3_ref, b3_ref,
                    w4_ref, b4_ref,
                    o_ref):
    # x_ref: (in_dim, tb) f32, feature-major (batch on lanes).
    x = x_ref[...]
    in_dim = x_ref.shape[0]

    # fc1 + ReLU on the VPU (f32): h[j, b] = sum_k w1[j, k] * x[k, b] + b1[j]
    w1 = w1_ref[...]                               # (64, in_dim) f32
    h = b1_ref[...]                                # (64, 1) f32
    for k in range(in_dim):                        # unrolled at trace time
        h = h + w1[:, k:k + 1] * x[k:k + 1, :]     # (64,1)*(1,tb) -> (64,tb)
    h = jnp.maximum(h, 0.0)

    # fc2 + ReLU on the MXU: (128, 64) @ (64, tb), bf16 operands, f32 accumulate.
    h = jnp.dot(w2_ref[...], h.astype(jnp.bfloat16),
                preferred_element_type=jnp.float32)
    h = jnp.maximum(h + b2_ref[...], 0.0)

    # fc3 + ReLU on the MXU: (64, 128) @ (128, tb).
    h = jnp.dot(w3_ref[...], h.astype(jnp.bfloat16),
                preferred_element_type=jnp.float32)
    h = jnp.maximum(h + b3_ref[...], 0.0)

    # fc4 (N = 2) on VPU + XLU: per-output multiply + cross-sublane reduce.
    w4t = w4_ref[...]                              # (64, 2) f32
    y0 = jnp.sum(w4t[:, 0:1] * h, axis=0, keepdims=True)   # (1, tb)
    y1 = jnp.sum(w4t[:, 1:2] * h, axis=0, keepdims=True)   # (1, tb)
    out = jnp.concatenate([y0, y1], axis=0) + b4_ref[...]  # (2, tb) lane-dense
    o_ref[...] = out.astype(o_ref.dtype)


def _round_up(a, m):
    return ((a + m - 1) // m) * m


def sir_network_forward(x, params, *, tb=2048):
    """Forward pass. x: (B, input_size) f32 -> (B, 2) f32.

    The two wrapper transposes (x -> feature-major, result -> batch-major) keep
    the PyTorch-module interface; callers that already hold feature-major data
    can skip them and feed/consume (in_dim, B) / (2, B) directly.
    """
    B, in_dim = x.shape

    xt = x.T                                       # (in_dim, B) lane-dense

    # bf16 only for the two MXU layers; fc1/fc4 weights stay f32 (VPU/XLU path).
    w1, b1 = params["w1"], params["b1"]
    w2, b2 = params["w2"].astype(jnp.bfloat16), params["b2"]
    w3, b3 = params["w3"].astype(jnp.bfloat16), params["b3"]
    w4t, b4 = params["w4t"], params["b4"]

    # Batch tiling: single full block for small B (no padding, no wasted rows),
    # otherwise a lane-aligned tile giving >= 2 grid steps (v7x megacore).
    if B <= 256:
        tb_eff = B
    else:
        tb_eff = min(tb, _round_up(pl.cdiv(B, 2), 128))
    grid = (pl.cdiv(B, tb_eff),)

    def resident(a):                               # VMEM-resident parameter
        return pl.BlockSpec(a.shape, lambda i: (0, 0))

    in_specs = [pl.BlockSpec((in_dim, tb_eff), lambda i: (0, i))]
    args = [xt]
    for w, b in ((w1, b1), (w2, b2), (w3, b3), (w4t, b4)):
        in_specs += [resident(w), resident(b)]
        args += [w, b]

    flops = 2 * B * (in_dim * 64 + 64 * 128 + 128 * 64 + 64 * 2)
    bytes_accessed = int(sum(int(a.size) * a.dtype.itemsize for a in args)
                         + B * 2 * 4)

    out_t = pl.pallas_call(
        _sir_mlp_kernel,
        out_shape=jax.ShapeDtypeStruct((2, B), jnp.float32),
        grid=grid,
        in_specs=in_specs,
        out_specs=pl.BlockSpec((2, tb_eff), lambda i: (0, i)),
        compiler_params=pltpu.CompilerParams(
            dimension_semantics=("parallel",)),
        cost_estimate=pl.CostEstimate(
            flops=flops, transcendentals=0, bytes_accessed=bytes_accessed),
    )(*args)

    return out_t.T                                 # (B, 2), PyTorch semantics


def init_sir_params(key, input_size):
    """PyTorch nn.Linear default init: U(-1/sqrt(fan_in), +1/sqrt(fan_in)).

    fc1..fc3 weights keep PyTorch's (out_features, in_features) layout (the
    feature-major kernel consumes them directly); fc4 is stored transposed as
    `w4t` (in_features, out_features).  Biases are (out_features, 1)."""
    dims = [("w1", "b1", 64, input_size),
            ("w2", "b2", 128, 64),
            ("w3", "b3", 64, 128),
            ("w4", "b4", 2, 64)]
    params = {}
    for wn, bn, fan_out, fan_in in dims:
        key, kw, kb = jax.random.split(key, 3)
        bound = 1.0 / math.sqrt(fan_in)
        params[wn] = jax.random.uniform(kw, (fan_out, fan_in), jnp.float32,
                                        minval=-bound, maxval=bound)
        params[bn] = jax.random.uniform(kb, (fan_out, 1), jnp.float32,
                                        minval=-bound, maxval=bound)
    params["w4t"] = params.pop("w4").T             # (64, 2)
    return params


def sir_network_reference(x, params):
    """Plain-JAX f32 reference of the same forward pass (batch-major)."""
    h = jnp.maximum(x @ params["w1"].T + params["b1"][:, 0], 0.0)
    h = jnp.maximum(h @ params["w2"].T + params["b2"][:, 0], 0.0)
    h = jnp.maximum(h @ params["w3"].T + params["b3"][:, 0], 0.0)
    return h @ params["w4t"] + params["b4"][:, 0]


if __name__ == "__main__":
    key = jax.random.PRNGKey(0)
    key, kx = jax.random.split(key)

    input_size = 4       # e.g. (t, S, I, R)-style features
    batch = 8

    x = jax.random.normal(kx, (batch, input_size), dtype=jnp.float32)
    params = init_sir_params(key, input_size)

    out = sir_network_forward(x, params)
    out = jax.block_until_ready(out)

    ref = sir_network_reference(x, params)
    assert out.shape == (batch, 2)
    # fc2/fc3 use bf16 operands with f32 accumulation -> relaxed tolerance.
    assert jnp.allclose(out, ref, atol=2e-2, rtol=2e-2), (
        float(jnp.max(jnp.abs(out - ref))))

    print("KERNEL_OK")
</pallas_src>

<mosaic_0001>
module attributes {stable_mosaic.version = 11 : i64} {
  func.func @_sir_mlp_kernel(%arg0: i32, %arg1: memref<4x8xf32, #tpu.memory_space<vmem>>, %arg2: memref<64x4xf32, #tpu.memory_space<vmem>>, %arg3: memref<64x1xf32, #tpu.memory_space<vmem>>, %arg4: memref<128x64xbf16, #tpu.memory_space<vmem>>, %arg5: memref<128x1xf32, #tpu.memory_space<vmem>>, %arg6: memref<64x128xbf16, #tpu.memory_space<vmem>>, %arg7: memref<64x1xf32, #tpu.memory_space<vmem>>, %arg8: memref<64x2xf32, #tpu.memory_space<vmem>>, %arg9: memref<2x1xf32, #tpu.memory_space<vmem>>, %arg10: memref<2x8xf32, #tpu.memory_space<vmem>>) attributes {dimension_semantics = [#tpu.dimension_semantics<parallel>], iteration_bounds = array<i64: 1>, scalar_prefetch = 0 : i64, scratch_operands = 0 : i64, tpu.core_type = #tpu.core_type<tc>, window_params = [{transform_indices = @transform_0, window_bounds = array<i64: 4, 8>}, {pipeline_mode = #tpu.pipeline_mode<synchronous>, transform_indices = @transform_1, window_bounds = array<i64: 64, 4>}, {pipeline_mode = #tpu.pipeline_mode<synchronous>, transform_indices = @transform_2, window_bounds = array<i64: 64, 1>}, {pipeline_mode = #tpu.pipeline_mode<synchronous>, transform_indices = @transform_3, window_bounds = array<i64: 128, 64>}, {pipeline_mode = #tpu.pipeline_mode<synchronous>, transform_indices = @transform_4, window_bounds = array<i64: 128, 1>}, {pipeline_mode = #tpu.pipeline_mode<synchronous>, transform_indices = @transform_5, window_bounds = array<i64: 64, 128>}, {pipeline_mode = #tpu.pipeline_mode<synchronous>, transform_indices = @transform_6, window_bounds = array<i64: 64, 1>}, {pipeline_mode = #tpu.pipeline_mode<synchronous>, transform_indices = @transform_7, window_bounds = array<i64: 64, 2>}, {pipeline_mode = #tpu.pipeline_mode<synchronous>, transform_indices = @transform_8, window_bounds = array<i64: 2, 1>}, {transform_indices = @transform_9, window_bounds = array<i64: 2, 8>}]} {
    %c0 = arith.constant 0 : index
    %c0_0 = arith.constant 0 : index
    %0 = vector.load %arg1[%c0, %c0_0] : memref<4x8xf32, #tpu.memory_space<vmem>>, vector<4x8xf32>
    %c0_1 = arith.constant 0 : index
    %c0_2 = arith.constant 0 : index
    %1 = vector.load %arg2[%c0_1, %c0_2] : memref<64x4xf32, #tpu.memory_space<vmem>>, vector<64x4xf32>
    %c0_3 = arith.constant 0 : index
    %c0_4 = arith.constant 0 : index
    %2 = vector.load %arg3[%c0_3, %c0_4] : memref<64x1xf32, #tpu.memory_space<vmem>>, vector<64x1xf32>
    %3 = vector.extract_strided_slice %1 {offsets = [0, 0], sizes = [64, 1], strides = [1, 1]} : vector<64x4xf32> to vector<64x1xf32>
    %4 = vector.extract_strided_slice %0 {offsets = [0, 0], sizes = [1, 8], strides = [1, 1]} : vector<4x8xf32> to vector<1x8xf32>
    %5 = vector.broadcast %3 : vector<64x1xf32> to vector<64x8xf32>
    %6 = vector.broadcast %4 : vector<1x8xf32> to vector<64x8xf32>
    %7 = arith.mulf %5, %6 : vector<64x8xf32>
    %8 = vector.broadcast %2 : vector<64x1xf32> to vector<64x8xf32>
    %9 = arith.addf %8, %7 : vector<64x8xf32>
    %10 = vector.extract_strided_slice %1 {offsets = [0, 1], sizes = [64, 1], strides = [1, 1]} : vector<64x4xf32> to vector<64x1xf32>
    %11 = vector.extract_strided_slice %0 {offsets = [1, 0], sizes = [1, 8], strides = [1, 1]} : vector<4x8xf32> to vector<1x8xf32>
    %12 = vector.broadcast %10 : vector<64x1xf32> to vector<64x8xf32>
    %13 = vector.broadcast %11 : vector<1x8xf32> to vector<64x8xf32>
    %14 = arith.mulf %12, %13 : vector<64x8xf32>
    %15 = arith.addf %9, %14 : vector<64x8xf32>
    %16 = vector.extract_strided_slice %1 {offsets = [0, 2], sizes = [64, 1], strides = [1, 1]} : vector<64x4xf32> to vector<64x1xf32>
    %17 = vector.extract_strided_slice %0 {offsets = [2, 0], sizes = [1, 8], strides = [1, 1]} : vector<4x8xf32> to vector<1x8xf32>
    %18 = vector.broadcast %16 : vector<64x1xf32> to vector<64x8xf32>
    %19 = vector.broadcast %17 : vector<1x8xf32> to vector<64x8xf32>
    %20 = arith.mulf %18, %19 : vector<64x8xf32>
    %21 = arith.addf %15, %20 : vector<64x8xf32>
    %22 = vector.extract_strided_slice %1 {offsets = [0, 3], sizes = [64, 1], strides = [1, 1]} : vector<64x4xf32> to vector<64x1xf32>
    %23 = vector.extract_strided_slice %0 {offsets = [3, 0], sizes = [1, 8], strides = [1, 1]} : vector<4x8xf32> to vector<1x8xf32>
    %24 = vector.broadcast %22 : vector<64x1xf32> to vector<64x8xf32>
    %25 = vector.broadcast %23 : vector<1x8xf32> to vector<64x8xf32>
    %26 = arith.mulf %24, %25 : vector<64x8xf32>
    %27 = arith.addf %21, %26 : vector<64x8xf32>
    %cst = arith.constant 0.000000e+00 : f32
    %28 = vector.broadcast %cst : f32 to vector<64x8xf32>
    %29 = arith.maximumf %27, %28 : vector<64x8xf32>
    %c0_5 = arith.constant 0 : index
    %c0_6 = arith.constant 0 : index
    %30 = vector.load %arg4[%c0_5, %c0_6] : memref<128x64xbf16, #tpu.memory_space<vmem>>, vector<128x64xbf16>
    %31 = arith.truncf %29 : vector<64x8xf32> to vector<64x8xbf16>
    %cst_7 = arith.constant dense<0.000000e+00> : vector<128x8xf32>
    %32 = tpu.matmul %30, %31, %cst_7 {dimension_numbers = #tpu.dot_dimension_numbers<[1], [0], [0], [1], [0, 0, 1, 1], [], []>} : vector<128x64xbf16>, vector<64x8xbf16>, vector<128x8xf32> -> vector<128x8xf32>
    %c0_8 = arith.constant 0 : index
    %c0_9 = arith.constant 0 : index
    %33 = vector.load %arg5[%c0_8, %c0_9] : memref<128x1xf32, #tpu.memory_space<vmem>>, vector<128x1xf32>
    %34 = vector.broadcast %33 : vector<128x1xf32> to vector<128x8xf32>
    %35 = arith.addf %32, %34 : vector<128x8xf32>
    %cst_10 = arith.constant 0.000000e+00 : f32
    %36 = vector.broadcast %cst_10 : f32 to vector<128x8xf32>
    %37 = arith.maximumf %35, %36 : vector<128x8xf32>
    %c0_11 = arith.constant 0 : index
    %c0_12 = arith.constant 0 : index
    %38 = vector.load %arg6[%c0_11, %c0_12] : memref<64x128xbf16, #tpu.memory_space<vmem>>, vector<64x128xbf16>
    %39 = arith.truncf %37 : vector<128x8xf32> to vector<128x8xbf16>
    %cst_13 = arith.constant dense<0.000000e+00> : vector<64x8xf32>
    %40 = tpu.matmul %38, %39, %cst_13 {dimension_numbers = #tpu.dot_dimension_numbers<[1], [0], [0], [1], [0, 0, 1, 1], [], []>} : vector<64x128xbf16>, vector<128x8xbf16>, vector<64x8xf32> -> vector<64x8xf32>
    %c0_14 = arith.constant 0 : index
    %c0_15 = arith.constant 0 : index
    %41 = vector.load %arg7[%c0_14, %c0_15] : memref<64x1xf32, #tpu.memory_space<vmem>>, vector<64x1xf32>
    %42 = vector.broadcast %41 : vector<64x1xf32> to vector<64x8xf32>
    %43 = arith.addf %40, %42 : vector<64x8xf32>
    %cst_16 = arith.constant 0.000000e+00 : f32
    %44 = vector.broadcast %cst_16 : f32 to vector<64x8xf32>
    %45 = arith.maximumf %43, %44 : vector<64x8xf32>
    %c0_17 = arith.constant 0 : index
    %c0_18 = arith.constant 0 : index
    %46 = vector.load %arg8[%c0_17, %c0_18] : memref<64x2xf32, #tpu.memory_space<vmem>>, vector<64x2xf32>
    %47 = vector.extract_strided_slice %46 {offsets = [0, 0], sizes = [64, 1], strides = [1, 1]} : vector<64x2xf32> to vector<64x1xf32>
    %48 = vector.broadcast %47 : vector<64x1xf32> to vector<64x8xf32>
    %49 = arith.mulf %48, %45 : vector<64x8xf32>
    %cst_19 = arith.constant dense<0.000000e+00> : vector<8xf32>
    %50 = vector.multi_reduction <add>, %49, %cst_19 [0] : vector<64x8xf32> to vector<8xf32>
    %51 = vector.shape_cast %50 : vector<8xf32> to vector<1x8xf32>
    %52 = vector.extract_strided_slice %46 {offsets = [0, 1], sizes = [64, 1], strides = [1, 1]} : vector<64x2xf32> to vector<64x1xf32>
    %53 = vector.broadcast %52 : vector<64x1xf32> to vector<64x8xf32>
    %54 = arith.mulf %53, %45 : vector<64x8xf32>
    %cst_20 = arith.constant dense<0.000000e+00> : vector<8xf32>
    %55 = vector.multi_reduction <add>, %54, %cst_20 [0] : vector<64x8xf32> to vector<8xf32>
    %56 = vector.shape_cast %55 : vector<8xf32> to vector<1x8xf32>
    %57 = tpu.concatenate %51, %56 in 0 : vector<1x8xf32>, vector<1x8xf32> -> vector<2x8xf32>
    %c0_21 = arith.constant 0 : index
    %c0_22 = arith.constant 0 : index
    %58 = vector.load %arg9[%c0_21, %c0_22] : memref<2x1xf32, #tpu.memory_space<vmem>>, vector<2x1xf32>
    %59 = vector.broadcast %58 : vector<2x1xf32> to vector<2x8xf32>
    %60 = arith.addf %57, %59 : vector<2x8xf32>
    %c0_23 = arith.constant 0 : index
    %c0_24 = arith.constant 0 : index
    %61 = vector.load %arg10[%c0_23, %c0_24] : memref<2x8xf32, #tpu.memory_space<vmem>>, vector<2x8xf32>
    tpu.vector_store %arg10[%c0_23, %c0_24], %60 {strides = array<i32>} : memref<2x8xf32, #tpu.memory_space<vmem>>, vector<2x8xf32>,
    return
  }
  func.func @transform_0(%arg0: i32) -> (i32, i32) {
    %c0_i32 = arith.constant 0 : i32
    %c0_i32_0 = arith.constant 0 : i32
    return %c0_i32, %arg0 : i32, i32
  }
  func.func @transform_1(%arg0: i32) -> (i32, i32) {
    %c0_i32 = arith.constant 0 : i32
    %c0_i32_0 = arith.constant 0 : i32
    %c0_i32_1 = arith.constant 0 : i32
    return %c0_i32, %c0_i32_0 : i32, i32
  }
  func.func @transform_2(%arg0: i32) -> (i32, i32) {
    %c0_i32 = arith.constant 0 : i32
    %c0_i32_0 = arith.constant 0 : i32
    %c0_i32_1 = arith.constant 0 : i32
    return %c0_i32, %c0_i32_0 : i32, i32
  }
  func.func @transform_3(%arg0: i32) -> (i32, i32) {
    %c0_i32 = arith.constant 0 : i32
    %c0_i32_0 = arith.constant 0 : i32
    %c0_i32_1 = arith.constant 0 : i32
    return %c0_i32, %c0_i32_0 : i32, i32
  }
  func.func @transform_4(%arg0: i32) -> (i32, i32) {
    %c0_i32 = arith.constant 0 : i32
    %c0_i32_0 = arith.constant 0 : i32
    %c0_i32_1 = arith.constant 0 : i32
    return %c0_i32, %c0_i32_0 : i32, i32
  }
  func.func @transform_5(%arg0: i32) -> (i32, i32) {
    %c0_i32 = arith.constant 0 : i32
    %c0_i32_0 = arith.constant 0 : i32
    %c0_i32_1 = arith.constant 0 : i32
    return %c0_i32, %c0_i32_0 : i32, i32
  }
  func.func @transform_6(%arg0: i32) -> (i32, i32) {
    %c0_i32 = arith.constant 0 : i32
    %c0_i32_0 = arith.constant 0 : i32
    %c0_i32_1 = arith.constant 0 : i32
    return %c0_i32, %c0_i32_0 : i32, i32
  }
  func.func @transform_7(%arg0: i32) -> (i32, i32) {
    %c0_i32 = arith.constant 0 : i32
    %c0_i32_0 = arith.constant 0 : i32
    %c0_i32_1 = arith.constant 0 : i32
    return %c0_i32, %c0_i32_0 : i32, i32
  }
  func.func @transform_8(%arg0: i32) -> (i32, i32) {
    %c0_i32 = arith.constant 0 : i32
    %c0_i32_0 = arith.constant 0 : i32
    %c0_i32_1 = arith.constant 0 : i32
    return %c0_i32, %c0_i32_0 : i32, i32
  }
  func.func @transform_9(%arg0: i32) -> (i32, i32) {
    %c0_i32 = arith.constant 0 : i32
    %c0_i32_0 = arith.constant 0 : i32
    return %c0_i32, %arg0 : i32, i32
  }
}

</mosaic_0001>

<llo_original>
// kernel: tpu_custom_call.1
$region0: #{tpu_custom_call.1}
  #allocation0 [shape = 'u32[]', space=smem, size = 0x4, offset = 0x4, fixed_abs, tag = 'smem constant byte address 0x4 - core index']
  #allocation1 [shape = 'u32[144,128]{1,0:T(1,128)}', space=vmem, size = 0x12000, scoped, tag = 'internal scratch']
  %s0 = inlined_call_operand.vmem [shape: f32[4,8], index: 0, kind: input, shape index: {}]
  %s1 = inlined_call_operand.vmem [shape: f32[64,4], index: 1, kind: input, shape index: {}]
  %s2 = inlined_call_operand.vmem [shape: f32[64,1], index: 2, kind: input, shape index: {}]
  %s3 = inlined_call_operand.vmem [shape: bf16[128,64], index: 3, kind: input, shape index: {}]
  %s4 = inlined_call_operand.vmem [shape: f32[128,1], index: 4, kind: input, shape index: {}]
  %s5 = inlined_call_operand.vmem [shape: bf16[64,128], index: 5, kind: input, shape index: {}]
  %s6 = inlined_call_operand.vmem [shape: f32[64,1], index: 6, kind: input, shape index: {}]
  %s7 = inlined_call_operand.vmem [shape: f32[64,2], index: 7, kind: input, shape index: {}]
  %s8 = inlined_call_operand.vmem [shape: f32[2,1], index: 8, kind: input, shape index: {}]
  %s9 = inlined_call_operand.hbm [shape: f32[2,8], index: 9, kind: output, shape index: {}]
  %s10 = sld [smem:[#allocation0]]
  $region46: #{tpu_custom_call.1} parent=0
    _
  %s12 = ssub.s32 1, %s10
  %s13 = scalar_select 0, %s12, %s10
  $region1: #{tpu_custom_call.1} parent=0
    #allocation2 [shape = 'u8[1024]{0}', space=vmem, size = 0x400, scoped, tag = 'output window, operand 0, single buffered']
    #allocation3 [shape = 's32[1]{0}', space=sflag, size = 0x4, scoped, tag = 'scoped memory for tpu_custom_call.1']
    %14 = vsyncpa [#allocation3], 0
    // Predicated region
    $region2: #{tpu_custom_call.1} parent=1 // pred_check
      _
    $region3: #{tpu_custom_call.1} parent=1 // pred_check_branch
      %16 = sbr.rel (0) target = $region5
    $region4: #{tpu_custom_call.1} parent=1 // pred_region
      _
    $region5: #{tpu_custom_call.1} parent=1 // pred_fallthru
      _
    // Predicated region
    $region6: #{tpu_custom_call.1} parent=1 // pred_check
      _
    $region7: #{tpu_custom_call.1} parent=1 // pred_check_branch
      %18 = sbr.rel (0) target = $region9
    $region8: #{tpu_custom_call.1} parent=1 // pred_region
      _
    $region9: #{tpu_custom_call.1} parent=1 // pred_fallthru
      _
    // Predicated region
    $region10: #{tpu_custom_call.1} parent=1 // pred_check
      _
    $region11: #{tpu_custom_call.1} parent=1 // pred_check_branch
      %20 = sbr.rel (0) target = $region13
    $region12: #{tpu_custom_call.1} parent=1 // pred_region
      _
    $region13: #{tpu_custom_call.1} parent=1 // pred_fallthru
      _
    // Predicated region
    $region14: #{tpu_custom_call.1} parent=1 // pred_check
      _
    $region15: #{tpu_custom_call.1} parent=1 // pred_check_branch
      %22 = sbr.rel (0) target = $region17
    $region16: #{tpu_custom_call.1} parent=1 // pred_region
      _
    $region17: #{tpu_custom_call.1} parent=1 // pred_fallthru
      _
    // Predicated region
    $region18: #{tpu_custom_call.1} parent=1 // pred_check
      _
    $region19: #{tpu_custom_call.1} parent=1 // pred_check_branch
      %24 = sbr.rel (0) target = $region21
    $region20: #{tpu_custom_call.1} parent=1 // pred_region
      _
    $region21: #{tpu_custom_call.1} parent=1 // pred_fallthru
      _
    // Predicated region
    $region22: #{tpu_custom_call.1} parent=1 // pred_check
      _
    $region23: #{tpu_custom_call.1} parent=1 // pred_check_branch
      %26 = sbr.rel (0) target = $region25
    $region24: #{tpu_custom_call.1} parent=1 // pred_region
      _
    $region25: #{tpu_custom_call.1} parent=1 // pred_fallthru
      _
    // Predicated region
    $region26: #{tpu_custom_call.1} parent=1 // pred_check
      _
    $region27: #{tpu_custom_call.1} parent=1 // pred_check_branch
      %28 = sbr.rel (0) target = $region29
    $region28: #{tpu_custom_call.1} parent=1 // pred_region
      _
    $region29: #{tpu_custom_call.1} parent=1 // pred_fallthru
      _
    // Predicated region
    $region30: #{tpu_custom_call.1} parent=1 // pred_check
      _
    $region31: #{tpu_custom_call.1} parent=1 // pred_check_branch
      %30 = sbr.rel (0) target = $region33
    $region32: #{tpu_custom_call.1} parent=1 // pred_region
      _
    $region33: #{tpu_custom_call.1} parent=1 // pred_fallthru
      _
    // Predicated region
    $region34: #{tpu_custom_call.1} parent=1 // pred_check
      _
    $region35: #{tpu_custom_call.1} parent=1 // pred_check_branch
      %32 = sbr.rel (0) target = $region37
    $region36: #{tpu_custom_call.1} parent=1 // pred_region
      _
    $region37: #{tpu_custom_call.1} parent=1 // pred_fallthru
      _
    %v34 = vld [vmem:[%s0] sm:$0xf]
    %v35 = vld [vmem:[%s1] sm:$0xff]
    %v36 = vld [vmem:[%s1 + $0x8] sm:$0xff]
    %v37 = vld [vmem:[%s1 + $0x10] sm:$0xff]
    %v38 = vld [vmem:[%s1 + $0x18] sm:$0xff]
    %v39 = vld [vmem:[%s1 + $0x20] sm:$0xff]
    %v40 = vld [vmem:[%s1 + $0x28] sm:$0xff]
    %v41 = vld [vmem:[%s1 + $0x30] sm:$0xff]
    %v42 = vld [vmem:[%s1 + $0x38] sm:$0xff]
    %v43 = vld [vmem:[%s2] sm:$0xff]
    %v44 = vld [vmem:[%s2 + $0x8] sm:$0xff]
    %v45 = vld [vmem:[%s2 + $0x10] sm:$0xff]
    %v46 = vld [vmem:[%s2 + $0x18] sm:$0xff]
    %v47 = vld [vmem:[%s2 + $0x20] sm:$0xff]
    %v48 = vld [vmem:[%s2 + $0x28] sm:$0xff]
    %v49 = vld [vmem:[%s2 + $0x30] sm:$0xff]
    %v50 = vld [vmem:[%s2 + $0x38] sm:$0xff]
    %52 = vset.pattern.permute.xlu0 0
    %53 = vperm.xlu0 %52, %v35
    %v54 = vpop.permute.xlu0 %53
    %57 = vset.pattern.permute.xlu0 0
    %58 = vperm.xlu0 %57, %v36
    %v59 = vpop.permute.xlu0 %58
    %62 = vset.pattern.permute.xlu0 0
    %63 = vperm.xlu0 %62, %v37
    %v64 = vpop.permute.xlu0 %63
    %67 = vset.pattern.permute.xlu0 0
    %68 = vperm.xlu0 %67, %v38
    %v69 = vpop.permute.xlu0 %68
    %72 = vset.pattern.permute.xlu0 0
    %73 = vperm.xlu0 %72, %v39
    %v74 = vpop.permute.xlu0 %73
    %77 = vset.pattern.permute.xlu0 0
    %78 = vperm.xlu0 %77, %v40
    %v79 = vpop.permute.xlu0 %78
    %82 = vset.pattern.permute.xlu0 0
    %83 = vperm.xlu0 %82, %v41
    %v84 = vpop.permute.xlu0 %83
    %87 = vset.pattern.permute.xlu0 0
    %88 = vperm.xlu0 %87, %v42
    %v89 = vpop.permute.xlu0 %88
    %v91 = vlaneseq
    %v92 = vshrl.u32 %v91, 7
    %v93 = vsub.s32 0, %v92
    %v94 = vrot.slane %v34, %v93
    %v95 = vmul.f32 %v54, %v94
    %v96 = vmul.f32 %v59, %v94
    %v97 = vmul.f32 %v64, %v94
    %v98 = vmul.f32 %v69, %v94
    %v99 = vmul.f32 %v74, %v94
    %v100 = vmul.f32 %v79, %v94
    %v101 = vmul.f32 %v84, %v94
    %v102 = vmul.f32 %v89, %v94
    %104 = vset.pattern.permute.xlu0 0
    %105 = vperm.xlu0 %104, %v43
    %v106 = vpop.permute.xlu0 %105
    %109 = vset.pattern.permute.xlu0 0
    %110 = vperm.xlu0 %109, %v44
    %v111 = vpop.permute.xlu0 %110
    %114 = vset.pattern.permute.xlu0 0
    %115 = vperm.xlu0 %114, %v45
    %v116 = vpop.permute.xlu0 %115
    %119 = vset.pattern.permute.xlu0 0
    %120 = vperm.xlu0 %119, %v46
    %v121 = vpop.permute.xlu0 %120
    %124 = vset.pattern.permute.xlu0 0
    %125 = vperm.xlu0 %124, %v47
    %v126 = vpop.permute.xlu0 %125
    %129 = vset.pattern.permute.xlu0 0
    %130 = vperm.xlu0 %129, %v48
    %v131 = vpop.permute.xlu0 %130
    %134 = vset.pattern.permute.xlu0 0
    %135 = vperm.xlu0 %134, %v49
    %v136 = vpop.permute.xlu0 %135
    %139 = vset.pattern.permute.xlu0 0
    %140 = vperm.xlu0 %139, %v50
    %v141 = vpop.permute.xlu0 %140
    %v143 = vadd.f32 %v106, %v95
    %v144 = vadd.f32 %v111, %v96
    %v145 = vadd.f32 %v116, %v97
    %v146 = vadd.f32 %v121, %v98
    %v147 = vadd.f32 %v126, %v99
    %v148 = vadd.f32 %v131, %v100
    %v149 = vadd.f32 %v136, %v101
    %v150 = vadd.f32 %v141, %v102
    %151 = vset.pattern.permute.xlu0 1
    %152 = vperm.xlu0 %151, %v35
    %v153 = vpop.permute.xlu0 %152
    %155 = vset.pattern.permute.xlu0 1
    %156 = vperm.xlu0 %155, %v36
    %v157 = vpop.permute.xlu0 %156
    %159 = vset.pattern.permute.xlu0 1
    %160 = vperm.xlu0 %159, %v37
    %v161 = vpop.permute.xlu0 %160
    %163 = vset.pattern.permute.xlu0 1
    %164 = vperm.xlu0 %163, %v38
    %v165 = vpop.permute.xlu0 %164
    %167 = vset.pattern.permute.xlu0 1
    %168 = vperm.xlu0 %167, %v39
    %v169 = vpop.permute.xlu0 %168
    %171 = vset.pattern.permute.xlu0 1
    %172 = vperm.xlu0 %171, %v40
    %v173 = vpop.permute.xlu0 %172
    %175 = vset.pattern.permute.xlu0 1
    %176 = vperm.xlu0 %175, %v41
    %v177 = vpop.permute.xlu0 %176
    %179 = vset.pattern.permute.xlu0 1
    %180 = vperm.xlu0 %179, %v42
    %v181 = vpop.permute.xlu0 %180
    %v183 = vlaneseq
    %v184 = vshrl.u32 %v183, 7
    %v185 = vsub.s32 1, %v184
    %v186 = vrot.slane %v34, %v185
    %v187 = vmul.f32 %v153, %v186
    %v188 = vmul.f32 %v157, %v186
    %v189 = vmul.f32 %v161, %v186
    %v190 = vmul.f32 %v165, %v186
    %v191 = vmul.f32 %v169, %v186
    %v192 = vmul.f32 %v173, %v186
    %v193 = vmul.f32 %v177, %v186
    %v194 = vmul.f32 %v181, %v186
    %v195 = vadd.f32 %v143, %v187
    %v196 = vadd.f32 %v144, %v188
    %v197 = vadd.f32 %v145, %v189
    %v198 = vadd.f32 %v146, %v190
    %v199 = vadd.f32 %v147, %v191
    %v200 = vadd.f32 %v148, %v192
    %v201 = vadd.f32 %v149, %v193
    %v202 = vadd.f32 %v150, %v194
    %203 = vset.pattern.permute.xlu0 2
    %204 = vperm.xlu0 %203, %v35
    %v205 = vpop.permute.xlu0 %204
    %207 = vset.pattern.permute.xlu0 2
    %208 = vperm.xlu0 %207, %v36
    %v209 = vpop.permute.xlu0 %208
    %211 = vset.pattern.permute.xlu0 2
    %212 = vperm.xlu0 %211, %v37
    %v213 = vpop.permute.xlu0 %212
    %215 = vset.pattern.permute.xlu0 2
    %216 = vperm.xlu0 %215, %v38
    %v217 = vpop.permute.xlu0 %216
    %219 = vset.pattern.permute.xlu0 2
    %220 = vperm.xlu0 %219, %v39
    %v221 = vpop.permute.xlu0 %220
    %223 = vset.pattern.permute.xlu0 2
    %224 = vperm.xlu0 %223, %v40
    %v225 = vpop.permute.xlu0 %224
    %227 = vset.pattern.permute.xlu0 2
    %228 = vperm.xlu0 %227, %v41
    %v229 = vpop.permute.xlu0 %228
    %231 = vset.pattern.permute.xlu0 2
    %232 = vperm.xlu0 %231, %v42
    %v233 = vpop.permute.xlu0 %232
    %v235 = vlaneseq
    %v236 = vshrl.u32 %v235, 7
    %v237 = vsub.s32 2, %v236
    %v238 = vrot.slane %v34, %v237
    %v239 = vmul.f32 %v205, %v238
    %v240 = vmul.f32 %v209, %v238
    %v241 = vmul.f32 %v213, %v238
    %v242 = vmul.f32 %v217, %v238
    %v243 = vmul.f32 %v221, %v238
    %v244 = vmul.f32 %v225, %v238
    %v245 = vmul.f32 %v229, %v238
    %v246 = vmul.f32 %v233, %v238
    %v247 = vadd.f32 %v195, %v239
    %v248 = vadd.f32 %v196, %v240
    %v249 = vadd.f32 %v197, %v241
    %v250 = vadd.f32 %v198, %v242
    %v251 = vadd.f32 %v199, %v243
    %v252 = vadd.f32 %v200, %v244
    %v253 = vadd.f32 %v201, %v245
    %v254 = vadd.f32 %v202, %v246
    %255 = vset.pattern.permute.xlu0 3
    %256 = vperm.xlu0 %255, %v35
    %v257 = vpop.permute.xlu0 %256
    %259 = vset.pattern.permute.xlu0 3
    %260 = vperm.xlu0 %259, %v36
    %v261 = vpop.permute.xlu0 %260
    %263 = vset.pattern.permute.xlu0 3
    %264 = vperm.xlu0 %263, %v37
    %v265 = vpop.permute.xlu0 %264
    %267 = vset.pattern.permute.xlu0 3
    %268 = vperm.xlu0 %267, %v38
    %v269 = vpop.permute.xlu0 %268
    %271 = vset.pattern.permute.xlu0 3
    %272 = vperm.xlu0 %271, %v39
    %v273 = vpop.permute.xlu0 %272
    %275 = vset.pattern.permute.xlu0 3
    %276 = vperm.xlu0 %275, %v40
    %v277 = vpop.permute.xlu0 %276
    %279 = vset.pattern.permute.xlu0 3
    %280 = vperm.xlu0 %279, %v41
    %v281 = vpop.permute.xlu0 %280
    %283 = vset.pattern.permute.xlu0 3
    %284 = vperm.xlu0 %283, %v42
    %v285 = vpop.permute.xlu0 %284
    %v287 = vlaneseq
    %v288 = vshrl.u32 %v287, 7
    %v289 = vsub.s32 3, %v288
    %v290 = vrot.slane %v34, %v289
    %v291 = vmul.f32 %v257, %v290
    %v292 = vmul.f32 %v261, %v290
    %v293 = vmul.f32 %v265, %v290
    %v294 = vmul.f32 %v269, %v290
    %v295 = vmul.f32 %v273, %v290
    %v296 = vmul.f32 %v277, %v290
    %v297 = vmul.f32 %v281, %v290
    %v298 = vmul.f32 %v285, %v290
    %v299 = vadd.f32 %v247, %v291
    %v300 = vadd.f32 %v248, %v292
    %v301 = vadd.f32 %v249, %v293
    %v302 = vadd.f32 %v250, %v294
    %v303 = vadd.f32 %v251, %v295
    %v304 = vadd.f32 %v252, %v296
    %v305 = vadd.f32 %v253, %v297
    %v306 = vadd.f32 %v254, %v298
    %v307 = vmax.f32 %v299, 0.0
    %v308 = vmax.f32 %v300, 0.0
    %v309 = vmax.f32 %v301, 0.0
    %v310 = vmax.f32 %v302, 0.0
    %v311 = vmax.f32 %v303, 0.0
    %v312 = vmax.f32 %v304, 0.0
    %v313 = vmax.f32 %v305, 0.0
    %v314 = vmax.f32 %v306, 0.0
    %v315 = vld [vmem:[%s3] sm:$0xf]
    %v316 = vld [vmem:[%s3 + $0x4] sm:$0xf]
    %v317 = vld [vmem:[%s3 + $0x8] sm:$0xf]
    %v318 = vld [vmem:[%s3 + $0xc] sm:$0xf]
    %v319 = vld [vmem:[%s3 + $0x10] sm:$0xf]
    %v320 = vld [vmem:[%s3 + $0x14] sm:$0xf]
    %v321 = vld [vmem:[%s3 + $0x18] sm:$0xf]
    %v322 = vld [vmem:[%s3 + $0x1c] sm:$0xf]
    %v323 = vld [vmem:[%s3 + $0x20] sm:$0xf]
    %v324 = vld [vmem:[%s3 + $0x24] sm:$0xf]
    %v325 = vld [vmem:[%s3 + $0x28] sm:$0xf]
    %v326 = vld [vmem:[%s3 + $0x2c] sm:$0xf]
    %v327 = vld [vmem:[%s3 + $0x30] sm:$0xf]
    %v328 = vld [vmem:[%s3 + $0x34] sm:$0xf]
    %v329 = vld [vmem:[%s3 + $0x38] sm:$0xf]
    %v330 = vld [vmem:[%s3 + $0x3c] sm:$0xf]
    %v331 = vpack.c.bf16 %v308, %v307
    %v332 = vpack.c.bf16 %v310, %v309
    %v333 = vpack.c.bf16 %v312, %v311
    %v334 = vpack.c.bf16 %v314, %v313
    %v335 = vld [vmem:[%s4] sm:$0xff]
    %v336 = vld [vmem:[%s4 + $0x8] sm:$0xff]
    %v337 = vld [vmem:[%s4 + $0x10] sm:$0xff]
    %v338 = vld [vmem:[%s4 + $0x18] sm:$0xff]
    %v339 = vld [vmem:[%s4 + $0x20] sm:$0xff]
    %v340 = vld [vmem:[%s4 + $0x28] sm:$0xff]
    %v341 = vld [vmem:[%s4 + $0x30] sm:$0xff]
    %v342 = vld [vmem:[%s4 + $0x38] sm:$0xff]
    %v343 = vld [vmem:[%s4 + $0x40] sm:$0xff]
    %v344 = vld [vmem:[%s4 + $0x48] sm:$0xff]
    %v345 = vld [vmem:[%s4 + $0x50] sm:$0xff]
    %v346 = vld [vmem:[%s4 + $0x58] sm:$0xff]
    %v347 = vld [vmem:[%s4 + $0x60] sm:$0xff]
    %v348 = vld [vmem:[%s4 + $0x68] sm:$0xff]
    %v349 = vld [vmem:[%s4 + $0x70] sm:$0xff]
    %v350 = vld [vmem:[%s4 + $0x78] sm:$0xff]
    %352 = vset.pattern.permute.xlu0 0
    %353 = vperm.xlu0 %352, %v335
    %v354 = vpop.permute.xlu0 %353
    %357 = vset.pattern.permute.xlu0 0
    %358 = vperm.xlu0 %357, %v336
    %v359 = vpop.permute.xlu0 %358
    %362 = vset.pattern.permute.xlu0 0
    %363 = vperm.xlu0 %362, %v337
    %v364 = vpop.permute.xlu0 %363
    %367 = vset.pattern.permute.xlu0 0
    %368 = vperm.xlu0 %367, %v338
    %v369 = vpop.permute.xlu0 %368
    %372 = vset.pattern.permute.xlu0 0
    %373 = vperm.xlu0 %372, %v339
    %v374 = vpop.permute.xlu0 %373
    %377 = vset.pattern.permute.xlu0 0
    %378 = vperm.xlu0 %377, %v340
    %v379 = vpop.permute.xlu0 %378
    %382 = vset.pattern.permute.xlu0 0
    %383 = vperm.xlu0 %382, %v341
    %v384 = vpop.permute.xlu0 %383
    %387 = vset.pattern.permute.xlu0 0
    %388 = vperm.xlu0 %387, %v342
    %v389 = vpop.permute.xlu0 %388
    %392 = vset.pattern.permute.xlu0 0
    %393 = vperm.xlu0 %392, %v343
    %v394 = vpop.permute.xlu0 %393
    %397 = vset.pattern.permute.xlu0 0
    %398 = vperm.xlu0 %397, %v344
    %v399 = vpop.permute.xlu0 %398
    %402 = vset.pattern.permute.xlu0 0
    %403 = vperm.xlu0 %402, %v345
    %v404 = vpop.permute.xlu0 %403
    %407 = vset.pattern.permute.xlu0 0
    %408 = vperm.xlu0 %407, %v346
    %v409 = vpop.permute.xlu0 %408
    %412 = vset.pattern.permute.xlu0 0
    %413 = vperm.xlu0 %412, %v347
    %v414 = vpop.permute.xlu0 %413
    %417 = vset.pattern.permute.xlu0 0
    %418 = vperm.xlu0 %417, %v348
    %v419 = vpop.permute.xlu0 %418
    %422 = vset.pattern.permute.xlu0 0
    %423 = vperm.xlu0 %422, %v349
    %v424 = vpop.permute.xlu0 %423
    %427 = vset.pattern.permute.xlu0 0
    %428 = vperm.xlu0 %427, %v350
    %v429 = vpop.permute.xlu0 %428
    %v447 = vunpack.c.l.b16 %v315
    %v448 = vunpack.c.l.b16 %v316
    %v449 = vunpack.c.l.b16 %v317
    %v450 = vunpack.c.l.b16 %v318
    %v451 = vunpack.c.l.b16 %v319
    %v452 = vunpack.c.l.b16 %v320
    %v453 = vunpack.c.l.b16 %v321
    %v454 = vunpack.c.l.b16 %v322
    %v455 = vunpack.c.l.b16 %v323
    %v456 = vunpack.c.l.b16 %v324
    %v457 = vunpack.c.l.b16 %v325
    %v458 = vunpack.c.l.b16 %v326
    %v459 = vunpack.c.l.b16 %v327
    %v460 = vunpack.c.l.b16 %v328
    %v461 = vunpack.c.l.b16 %v329
    %v462 = vunpack.c.l.b16 %v330
    %v463 = vpack.c.b16 %v448, %v447
    %v464 = vpack.c.b16 %v450, %v449
    %v465 = vpack.c.b16 %v452, %v451
    %v466 = vpack.c.b16 %v454, %v453
    %v467 = vpack.c.b16 %v456, %v455
    %v468 = vpack.c.b16 %v458, %v457
    %v469 = vpack.c.b16 %v460, %v459
    %v470 = vpack.c.b16 %v462, %v461
    %vm471 = vcmask 523264
    %v473 = vsel %vm471, %v463, 0
    %v476 = vsel %vm471, %v464, 0
    %v479 = vsel %vm471, %v465, 0
    %v482 = vsel %vm471, %v466, 0
    %v485 = vsel %vm471, %v467, 0
    %v488 = vsel %vm471, %v468, 0
    %v491 = vsel %vm471, %v469, 0
    %v494 = vsel %vm471, %v470, 0
    %496 = vmatprep.subr.bf16.mxu0 0
    %497 = vmatpush1.bf16.msra.mxu0 %v331
    %498 = vmatprep.subr.bf16.mxu0 0
    %499 = vmatpush1.bf16.msra.mxu0 %v332
    %500 = vmatprep.subr.bf16.mxu0 0
    %501 = vmatpush1.bf16.msra.mxu0 %v333
    %502 = vmatprep.subr.bf16.mxu0 0
    %503 = vmatpush1.bf16.msra.mxu0 %v334
    %504 = vmatprep.subr.bf16.mxu0 0
    %505 = vmatpush1.bf16.msra.mxu0 0
    %506 = vmatprep.subr.bf16.mxu0 0
    %507 = vmatpush1.bf16.msra.mxu0 0
    %508 = vmatprep.subr.bf16.mxu0 0
    %509 = vmatpush1.bf16.msra.mxu0 0
    %510 = vmatprep.subr.bf16.mxu0 0
    %511 = vmatpush1.bf16.msra.mxu0 0
    %512 = vmatprep.subr.bf16.mxu0 0
    %513 = vmatpush1.bf16.msra.mxu0 0
    %514 = vmatprep.subr.bf16.mxu0 0
    %515 = vmatpush1.bf16.msra.mxu0 0
    %516 = vmatprep.subr.bf16.mxu0 0
    %517 = vmatpush1.bf16.msra.mxu0 0
    %518 = vmatprep.subr.bf16.mxu0 0
    %519 = vmatpush1.bf16.msra.mxu0 0
    %520 = vmatprep.subr.bf16.mxu0 0
    %521 = vmatpush1.bf16.msra.mxu0 0
    %522 = vmatprep.subr.bf16.mxu0 0
    %523 = vmatpush1.bf16.msra.mxu0 0
    %524 = vmatprep.subr.bf16.mxu0 0
    %525 = vmatpush1.bf16.msra.mxu0 0
    %526 = vmatprep.subr.bf16.mxu0 0
    %527 = vmatpush1.bf16.msra.mxu0 0
    %528 = vmatprep.mubr.bf16.mxu0 0
    %529 = vmatmul.mubr.bf16.gmra.mrb[0].mxu0 %v473
    %v530 = vpop.f32.mrb[0].mxu0
    %v531 = vadd.f32 %v354, %v530
    %v532 = vpop.f32.mrb[0].mxu0
    %v533 = vpop.f32.mrb[0].mxu0
    %v534 = vadd.f32 %v359, %v533
    %v535 = vpop.f32.mrb[0].mxu0
    %536 = vmatprep.mubr.bf16.mxu0 0
    %537 = vmatmul.mubr.bf16.gmra.mrb[0].mxu0 %v476
    %v538 = vpop.f32.mrb[0].mxu0
    %v539 = vadd.f32 %v364, %v538
    %v540 = vpop.f32.mrb[0].mxu0
    %v541 = vpop.f32.mrb[0].mxu0
    %v542 = vadd.f32 %v369, %v541
    %v543 = vpop.f32.mrb[0].mxu0
    %544 = vmatprep.mubr.bf16.mxu0 0
    %545 = vmatmul.mubr.bf16.gmra.mrb[0].mxu0 %v479
    %v546 = vpop.f32.mrb[0].mxu0
    %v547 = vadd.f32 %v374, %v546
    %v548 = vpop.f32.mrb[0].mxu0
    %v549 = vpop.f32.mrb[0].mxu0
    %v550 = vadd.f32 %v379, %v549
    %v551 = vpop.f32.mrb[0].mxu0
    %552 = vmatprep.mubr.bf16.mxu0 0
    %553 = vmatmul.mubr.bf16.gmra.mrb[0].mxu0 %v482
    %v554 = vpop.f32.mrb[0].mxu0
    %v555 = vadd.f32 %v384, %v554
    %v556 = vpop.f32.mrb[0].mxu0
    %v557 = vpop.f32.mrb[0].mxu0
    %v558 = vadd.f32 %v389, %v557
    %v559 = vpop.f32.mrb[0].mxu0
    %560 = vmatprep.mubr.bf16.mxu0 0
    %561 = vmatmul.mubr.bf16.gmra.mrb[0].mxu0 %v485
    %v562 = vpop.f32.mrb[0].mxu0
    %v563 = vadd.f32 %v394, %v562
    %v564 = vpop.f32.mrb[0].mxu0
    %v565 = vpop.f32.mrb[0].mxu0
    %v566 = vadd.f32 %v399, %v565
    %v567 = vpop.f32.mrb[0].mxu0
    %568 = vmatprep.mubr.bf16.mxu0 0
    %569 = vmatmul.mubr.bf16.gmra.mrb[0].mxu0 %v488
    %v570 = vpop.f32.mrb[0].mxu0
    %v571 = vadd.f32 %v404, %v570
    %v572 = vpop.f32.mrb[0].mxu0
    %v573 = vpop.f32.mrb[0].mxu0
    %v574 = vadd.f32 %v409, %v573
    %v575 = vpop.f32.mrb[0].mxu0
    %576 = vmatprep.mubr.bf16.mxu0 0
    %577 = vmatmul.mubr.bf16.gmra.mrb[0].mxu0 %v491
    %v578 = vpop.f32.mrb[0].mxu0
    %v579 = vadd.f32 %v414, %v578
    %v580 = vpop.f32.mrb[0].mxu0
    %v581 = vpop.f32.mrb[0].mxu0
    %v582 = vadd.f32 %v419, %v581
    %v583 = vpop.f32.mrb[0].mxu0
    %584 = vmatprep.mubr.bf16.mxu0 0
    %585 = vmatmul.mubr.bf16.gmra.mrb[0].mxu0 %v494
    %v586 = vpop.f32.mrb[0].mxu0
    %v587 = vadd.f32 %v424, %v586
    %v588 = vpop.f32.mrb[0].mxu0
    %v589 = vpop.f32.mrb[0].mxu0
    %v590 = vadd.f32 %v429, %v589
    %v591 = vpop.f32.mrb[0].mxu0
    %592 = vdwg.mxu0
    %v593 = vmax.f32 %v531, 0.0
    %v594 = vmax.f32 %v534, 0.0
    %v595 = vmax.f32 %v539, 0.0
    %v596 = vmax.f32 %v542, 0.0
    %v597 = vmax.f32 %v547, 0.0
    %v598 = vmax.f32 %v550, 0.0
    %v599 = vmax.f32 %v555, 0.0
    %v600 = vmax.f32 %v558, 0.0
    %v601 = vmax.f32 %v563, 0.0
    %v602 = vmax.f32 %v566, 0.0
    %v603 = vmax.f32 %v571, 0.0
    %v604 = vmax.f32 %v574, 0.0
    %v605 = vmax.f32 %v579, 0.0
    %v606 = vmax.f32 %v582, 0.0
    %v607 = vmax.f32 %v587, 0.0
    %v608 = vmax.f32 %v590, 0.0
    %v609 = vld [vmem:[%s5] sm:$0xf]
    %v610 = vld [vmem:[%s5 + $0x4] sm:$0xf]
    %v611 = vld [vmem:[%s5 + $0x8] sm:$0xf]
    %v612 = vld [vmem:[%s5 + $0xc] sm:$0xf]
    %v613 = vld [vmem:[%s5 + $0x10] sm:$0xf]
    %v614 = vld [vmem:[%s5 + $0x14] sm:$0xf]
    %v615 = vld [vmem:[%s5 + $0x18] sm:$0xf]
    %v616 = vld [vmem:[%s5 + $0x1c] sm:$0xf]
    %v617 = vpack.c.bf16 %v594, %v593
    %v618 = vpack.c.bf16 %v596, %v595
    %v619 = vpack.c.bf16 %v598, %v597
    %v620 = vpack.c.bf16 %v600, %v599
    %v621 = vpack.c.bf16 %v602, %v601
    %v622 = vpack.c.bf16 %v604, %v603
    %v623 = vpack.c.bf16 %v606, %v605
    %v624 = vpack.c.bf16 %v608, %v607
    %v625 = vld [vmem:[%s6] sm:$0xff]
    %v626 = vld [vmem:[%s6 + $0x8] sm:$0xff]
    %v627 = vld [vmem:[%s6 + $0x10] sm:$0xff]
    %v628 = vld [vmem:[%s6 + $0x18] sm:$0xff]
    %v629 = vld [vmem:[%s6 + $0x20] sm:$0xff]
    %v630 = vld [vmem:[%s6 + $0x28] sm:$0xff]
    %v631 = vld [vmem:[%s6 + $0x30] sm:$0xff]
    %v632 = vld [vmem:[%s6 + $0x38] sm:$0xff]
    %634 = vset.pattern.permute.xlu0 0
    %635 = vperm.xlu0 %634, %v625
    %v636 = vpop.permute.xlu0 %635
    %639 = vset.pattern.permute.xlu0 0
    %640 = vperm.xlu0 %639, %v626
    %v641 = vpop.permute.xlu0 %640
    %644 = vset.pattern.permute.xlu0 0
    %645 = vperm.xlu0 %644, %v627
    %v646 = vpop.permute.xlu0 %645
    %649 = vset.pattern.permute.xlu0 0
    %650 = vperm.xlu0 %649, %v628
    %v651 = vpop.permute.xlu0 %650
    %654 = vset.pattern.permute.xlu0 0
    %655 = vperm.xlu0 %654, %v629
    %v656 = vpop.permute.xlu0 %655
    %659 = vset.pattern.permute.xlu0 0
    %660 = vperm.xlu0 %659, %v630
    %v661 = vpop.permute.xlu0 %660
    %664 = vset.pattern.permute.xlu0 0
    %665 = vperm.xlu0 %664, %v631
    %v666 = vpop.permute.xlu0 %665
    %669 = vset.pattern.permute.xlu0 0
    %670 = vperm.xlu0 %669, %v632
    %v671 = vpop.permute.xlu0 %670
    %v681 = vunpack.c.l.b16 %v609
    %v682 = vunpack.c.l.b16 %v610
    %v683 = vunpack.c.l.b16 %v611
    %v684 = vunpack.c.l.b16 %v612
    %v685 = vunpack.c.l.b16 %v613
    %v686 = vunpack.c.l.b16 %v614
    %v687 = vunpack.c.l.b16 %v615
    %v688 = vunpack.c.l.b16 %v616
    %v689 = vpack.c.b16 %v682, %v681
    %v690 = vpack.c.b16 %v684, %v683
    %v691 = vpack.c.b16 %v686, %v685
    %v692 = vpack.c.b16 %v688, %v687
    %697 = vmatprep.subr.bf16.mxu0 0
    %698 = vmatpush1.bf16.msra.mxu0 %v617
    %699 = vmatprep.subr.bf16.mxu0 0
    %700 = vmatpush1.bf16.msra.mxu0 %v618
    %701 = vmatprep.subr.bf16.mxu0 0
    %702 = vmatpush1.bf16.msra.mxu0 %v619
    %703 = vmatprep.subr.bf16.mxu0 0
    %704 = vmatpush1.bf16.msra.mxu0 %v620
    %705 = vmatprep.subr.bf16.mxu0 0
    %706 = vmatpush1.bf16.msra.mxu0 %v621
    %707 = vmatprep.subr.bf16.mxu0 0
    %708 = vmatpush1.bf16.msra.mxu0 %v622
    %709 = vmatprep.subr.bf16.mxu0 0
    %710 = vmatpush1.bf16.msra.mxu0 %v623
    %711 = vmatprep.subr.bf16.mxu0 0
    %712 = vmatpush1.bf16.msra.mxu0 %v624
    %713 = vmatprep.subr.bf16.mxu0 0
    %714 = vmatpush1.bf16.msra.mxu0 0
    %715 = vmatprep.subr.bf16.mxu0 0
    %716 = vmatpush1.bf16.msra.mxu0 0
    %717 = vmatprep.subr.bf16.mxu0 0
    %718 = vmatpush1.bf16.msra.mxu0 0
    %719 = vmatprep.subr.bf16.mxu0 0
    %720 = vmatpush1.bf16.msra.mxu0 0
    %721 = vmatprep.subr.bf16.mxu0 0
    %722 = vmatpush1.bf16.msra.mxu0 0
    %723 = vmatprep.subr.bf16.mxu0 0
    %724 = vmatpush1.bf16.msra.mxu0 0
    %725 = vmatprep.subr.bf16.mxu0 0
    %726 = vmatpush1.bf16.msra.mxu0 0
    %727 = vmatprep.subr.bf16.mxu0 0
    %728 = vmatpush1.bf16.msra.mxu0 0
    %729 = vmatprep.mubr.bf16.mxu0 0
    %730 = vmatmul.mubr.bf16.gmra.mrb[0].mxu0 %v689
    %v731 = vpop.f32.mrb[0].mxu0
    %v732 = vadd.f32 %v636, %v731
    %v733 = vpop.f32.mrb[0].mxu0
    %v734 = vpop.f32.mrb[0].mxu0
    %v735 = vadd.f32 %v641, %v734
    %v736 = vpop.f32.mrb[0].mxu0
    %737 = vmatprep.mubr.bf16.mxu0 0
    %738 = vmatmul.mubr.bf16.gmra.mrb[0].mxu0 %v690
    %v739 = vpop.f32.mrb[0].mxu0
    %v740 = vadd.f32 %v646, %v739
    %v741 = vpop.f32.mrb[0].mxu0
    %v742 = vpop.f32.mrb[0].mxu0
    %v743 = vadd.f32 %v651, %v742
    %v744 = vpop.f32.mrb[0].mxu0
    %745 = vmatprep.mubr.bf16.mxu0 0
    %746 = vmatmul.mubr.bf16.gmra.mrb[0].mxu0 %v691
    %v747 = vpop.f32.mrb[0].mxu0
    %v748 = vadd.f32 %v656, %v747
    %v749 = vpop.f32.mrb[0].mxu0
    %v750 = vpop.f32.mrb[0].mxu0
    %v751 = vadd.f32 %v661, %v750
    %v752 = vpop.f32.mrb[0].mxu0
    %753 = vmatprep.mubr.bf16.mxu0 0
    %754 = vmatmul.mubr.bf16.gmra.mrb[0].mxu0 %v692
    %v755 = vpop.f32.mrb[0].mxu0
    %v756 = vadd.f32 %v666, %v755
    %v757 = vpop.f32.mrb[0].mxu0
    %v758 = vpop.f32.mrb[0].mxu0
    %v759 = vadd.f32 %v671, %v758
    %v760 = vpop.f32.mrb[0].mxu0
    %761 = vdwg.mxu0
    %v762 = vmax.f32 %v732, 0.0
    %v763 = vmax.f32 %v735, 0.0
    %v764 = vmax.f32 %v740, 0.0
    %v765 = vmax.f32 %v743, 0.0
    %v766 = vmax.f32 %v748, 0.0
    %v767 = vmax.f32 %v751, 0.0
    %v768 = vmax.f32 %v756, 0.0
    %v769 = vmax.f32 %v759, 0.0
    %v770 = vld [vmem:[%s7] sm:$0xff]
    %v771 = vld [vmem:[%s7 + $0x8] sm:$0xff]
    %v772 = vld [vmem:[%s7 + $0x10] sm:$0xff]
    %v773 = vld [vmem:[%s7 + $0x18] sm:$0xff]
    %v774 = vld [vmem:[%s7 + $0x20] sm:$0xff]
    %v775 = vld [vmem:[%s7 + $0x28] sm:$0xff]
    %v776 = vld [vmem:[%s7 + $0x30] sm:$0xff]
    %v777 = vld [vmem:[%s7 + $0x38] sm:$0xff]
    %779 = vset.pattern.permute.xlu0 0
    %780 = vperm.xlu0 %779, %v770
    %v781 = vpop.permute.xlu0 %780
    %784 = vset.pattern.permute.xlu0 0
    %785 = vperm.xlu0 %784, %v771
    %v786 = vpop.permute.xlu0 %785
    %789 = vset.pattern.permute.xlu0 0
    %790 = vperm.xlu0 %789, %v772
    %v791 = vpop.permute.xlu0 %790
    %794 = vset.pattern.permute.xlu0 0
    %795 = vperm.xlu0 %794, %v773
    %v796 = vpop.permute.xlu0 %795
    %799 = vset.pattern.permute.xlu0 0
    %800 = vperm.xlu0 %799, %v774
    %v801 = vpop.permute.xlu0 %800
    %804 = vset.pattern.permute.xlu0 0
    %805 = vperm.xlu0 %804, %v775
    %v806 = vpop.permute.xlu0 %805
    %809 = vset.pattern.permute.xlu0 0
    %810 = vperm.xlu0 %809, %v776
    %v811 = vpop.permute.xlu0 %810
    %814 = vset.pattern.permute.xlu0 0
    %815 = vperm.xlu0 %814, %v777
    %v816 = vpop.permute.xlu0 %815
    %v818 = vmul.f32 %v781, %v762
    %v819 = vmul.f32 %v786, %v763
    %v820 = vmul.f32 %v791, %v764
    %v821 = vmul.f32 %v796, %v765
    %v822 = vmul.f32 %v801, %v766
    %v823 = vmul.f32 %v806, %v767
    %v824 = vmul.f32 %v811, %v768
    %v825 = vmul.f32 %v816, %v769
    %vm826 = vcmask 64512
    %v827 = vsel %vm826, %v818, 0.0
    %v828 = vsel %vm826, %v819, 0.0
    %v829 = vadd.f32 %v827, %v828
    %v830 = vsel %vm826, %v820, 0.0
    %v831 = vadd.f32 %v829, %v830
    %v832 = vsel %vm826, %v821, 0.0
    %v833 = vadd.f32 %v831, %v832
    %v834 = vsel %vm826, %v822, 0.0
    %v835 = vadd.f32 %v833, %v834
    %v836 = vsel %vm826, %v823, 0.0
    %v837 = vadd.f32 %v835, %v836
    %v838 = vsel %vm826, %v824, 0.0
    %v839 = vadd.f32 %v837, %v838
    %v840 = vsel %vm826, %v825, 0.0
    %v841 = vadd.f32 %v839, %v840
    %v842 = vrot.slane %v841, 4
    %v843 = vadd.f32 %v841, %v842
    %v844 = vrot.slane %v843, 2
    %v845 = vadd.f32 %v843, %v844
    %v846 = vrot.slane %v845, 1
    %v847 = vadd.f32 %v845, %v846
    %848 = vset.pattern.permute.xlu0 1
    %849 = vperm.xlu0 %848, %v770
    %v850 = vpop.permute.xlu0 %849
    %852 = vset.pattern.permute.xlu0 1
    %853 = vperm.xlu0 %852, %v771
    %v854 = vpop.permute.xlu0 %853
    %856 = vset.pattern.permute.xlu0 1
    %857 = vperm.xlu0 %856, %v772
    %v858 = vpop.permute.xlu0 %857
    %860 = vset.pattern.permute.xlu0 1
    %861 = vperm.xlu0 %860, %v773
    %v862 = vpop.permute.xlu0 %861
    %864 = vset.pattern.permute.xlu0 1
    %865 = vperm.xlu0 %864, %v774
    %v866 = vpop.permute.xlu0 %865
    %868 = vset.pattern.permute.xlu0 1
    %869 = vperm.xlu0 %868, %v775
    %v870 = vpop.permute.xlu0 %869
    %872 = vset.pattern.permute.xlu0 1
    %873 = vperm.xlu0 %872, %v776
    %v874 = vpop.permute.xlu0 %873
    %876 = vset.pattern.permute.xlu0 1
    %877 = vperm.xlu0 %876, %v777
    %v878 = vpop.permute.xlu0 %877
    %v880 = vmul.f32 %v850, %v762
    %v881 = vmul.f32 %v854, %v763
    %v882 = vmul.f32 %v858, %v764
    %v883 = vmul.f32 %v862, %v765
    %v884 = vmul.f32 %v866, %v766
    %v885 = vmul.f32 %v870, %v767
    %v886 = vmul.f32 %v874, %v768
    %v887 = vmul.f32 %v878, %v769
    %v888 = vsel %vm826, %v880, 0.0
    %v889 = vsel %vm826, %v881, 0.0
    %v890 = vadd.f32 %v888, %v889
    %v891 = vsel %vm826, %v882, 0.0
    %v892 = vadd.f32 %v890, %v891
    %v893 = vsel %vm826, %v883, 0.0
    %v894 = vadd.f32 %v892, %v893
    %v895 = vsel %vm826, %v884, 0.0
    %v896 = vadd.f32 %v894, %v895
    %v897 = vsel %vm826, %v885, 0.0
    %v898 = vadd.f32 %v896, %v897
    %v899 = vsel %vm826, %v886, 0.0
    %v900 = vadd.f32 %v898, %v899
    %v901 = vsel %vm826, %v887, 0.0
    %v902 = vadd.f32 %v900, %v901
    %v903 = vrot.slane %v902, 4
    %v904 = vadd.f32 %v902, %v903
    %v905 = vrot.slane %v904, 2
    %v906 = vadd.f32 %v904, %v905
    %v907 = vrot.slane %v906, 1
    %v908 = vadd.f32 %v906, %v907
    %vm909 = vcmask 1040384
    %v910 = vsel %vm909, %v847, %v908
    %v911 = vld [vmem:[%s8] sm:$0x3]
    %913 = vset.pattern.permute.xlu0 0
    %914 = vperm.xlu0 %913, %v911
    %v915 = vpop.permute.xlu0 %914
    %v917 = vadd.f32 %v910, %v915
    %vm918 = vcmask 58368
    %919 = vst.msk [vmem:[#allocation2] sm:$0x3] %vm918, %v917
    // Predicated region
    $region38: #{tpu_custom_call.1} parent=1 // pred_check
      _
    $region39: #{tpu_custom_call.1} parent=1 // pred_check_branch
      %921 = sbr.rel (0) target = $region41
    $region40: #{tpu_custom_call.1} parent=1 // pred_region
      %s923 = ssub.s32 32, 32
      %924 = vsyncadd [#allocation3], %s923
      %s926 = sshll.u32 [#allocation2], 4
      %s927 = int_to_ptr.vmem [resolvable:$true] %s926
      %929 = dma.vmem_to_hbm [thread:$0]  %s927, 32, %s9, [#allocation3]
    $region41: #{tpu_custom_call.1} parent=1 // pred_fallthru
      _
    // Predicated region
    $region42: #{tpu_custom_call.1} parent=1 // pred_check
      _
    $region43: #{tpu_custom_call.1} parent=1 // pred_check_branch
      %931 = sbr.rel (0) target = $region45
    $region44: #{tpu_custom_call.1} parent=1 // pred_region
      %932 = dma.done [#allocation3], 32
    $region45: #{tpu_custom_call.1} parent=1 // pred_fallthru
      _
    %933 = vsyncpa [#allocation3], 1

</llo_original>
